<compile_context>
chip_gen: v5e
topology: v5e:2x2
jax: 0.10.0
libtpu: 0.0.40
codegen_flags: <defaults>
</compile_context>

<pallas_src>
import math
import functools

import jax
import jax.numpy as jnp
from jax import lax
from jax.experimental import pallas as pl
from jax.experimental.pallas import tpu as pltpu

BATCHNORM_EPSILON = 1e-4  # YAMNetParams.BATCHNORM_EPSILON


def _tf_same_pad(in_size, k, s, d=1):
    eff_k = (k - 1) * d + 1
    out_size = (in_size + s - 1) // s
    total = max(0, (out_size - 1) * s + eff_k - in_size)
    lo = total // 2
    hi = total - lo  # extra odd pixel goes to the bottom/right (TF behavior)
    return lo, hi, out_size


def _conv_bn_relu_kernel(x_ref, w_ref, shift_ref, o_ref, col_ref, *,
                         KH, KW, sH, sW, tH, W_out, C_in, C_out_pad, PW):
    # x_ref:     (P_used, Hp, Wp, C_in)      bf16 phase-decomposed padded image
    #            (resident across the H-tile grid axis)
    # w_ref:     (KH*KW*C_in, C_out_pad)     bf16, BN scale folded in
    # shift_ref: (1, C_out_pad)              f32  (beta - mean*scale)
    # o_ref:     (1, tH, W_out, C_out_pad)   bf16
    # col_ref:   (tH*W_out, KH*KW*C_in)      bf16 VMEM im2col scratch
    tM = tH * W_out
    h0 = pl.multiple_of(pl.program_id(1) * tH, tH)

    # Build the im2col tile: one cheap static-slice copy per tap.
    for kh in range(KH):
        for kw in range(KW):
            p = (kh % sH) * PW + (kw % sW)      # stride phase holding this tap
            dh, dw = kh // sH, kw // sW         # offsets inside the phase
            tap = kh * KW + kw
            xp = x_ref[p, pl.ds(h0 + dh, tH), dw:dw + W_out, :]  # (tH,W_out,C_in)
            col_ref[:, tap * C_in:(tap + 1) * C_in] = xp.reshape(tM, C_in)

    # One MXU matmul: (tH*W_out, KH*KW*C_in) @ (KH*KW*C_in, C_out_pad), f32 acc.
    y = jnp.dot(col_ref[...], w_ref[...], preferred_element_type=jnp.float32)
    y = y + shift_ref[...]                      # broadcast (1, C_out_pad)
    o_ref[0] = jnp.maximum(y, 0.0).reshape(tH, W_out, C_out_pad).astype(o_ref.dtype)


def conv_bn_relu(x_nchw, w_oihw, gamma, beta, running_mean, running_var,
                 stride, eps=BATCHNORM_EPSILON):
    N, C_in, H, W = x_nchw.shape
    C_out, _, KH, KW = w_oihw.shape
    sH, sW = (stride, stride) if isinstance(stride, int) else stride

    ph0, _, H_out = _tf_same_pad(H, KH, sH)
    pw0, _, W_out = _tf_same_pad(W, KW, sW)

    # ---- H_out tiling (second "parallel" grid axis); target tH*W_out ~ 256 ----
    tH = max(1, min(H_out, -(-256 // W_out)))
    nH = -(-H_out // tH)
    H_out_pad = nH * tH          # extra rows see only zero padding; sliced off below

    # ---- phase geometry: phase (p, q) holds padded pixel (r*sH+p, c*sW+q) ----
    dh_max, dw_max = (KH - 1) // sH, (KW - 1) // sW
    Hp = H_out_pad + dh_max
    Wp = W_out + dw_max
    H_tot, W_tot = Hp * sH, Wp * sW
    pad_b, pad_r = H_tot - H - ph0, W_tot - W - pw0
    assert pad_b >= 0 and pad_r >= 0
    PH, PW = min(sH, KH), min(sW, KW)     # only phases that taps actually read
    P = PH * PW

    # ---- glue (bf16 throughout): NCHW -> NHWC, TF-SAME pad, phase split ----
    x = jnp.transpose(x_nchw.astype(jnp.bfloat16), (0, 2, 3, 1))
    xpad = jnp.pad(x, ((0, 0), (ph0, pad_b), (pw0, pad_r), (0, 0)))
    phases = [xpad[:, p::sH, q::sW, :] for p in range(PH) for q in range(PW)]
    xph = jnp.stack(phases, axis=1).reshape(N * P, Hp, Wp, C_in)   # no duplication

    # ---- fold BN (eval / running-stats) into the weight and a per-ch shift ----
    scale = (gamma / jnp.sqrt(running_var + eps)).astype(jnp.float32)
    shift = (beta - running_mean * scale).astype(jnp.float32)
    C_out_pad = ((C_out + 127) // 128) * 128        # lane-dense output stores
    wm = jnp.transpose(w_oihw.astype(jnp.float32), (2, 3, 1, 0)) * scale
    wm = wm.reshape(KH * KW * C_in, C_out)          # taps folded into K
    wm = jnp.pad(wm, ((0, 0), (0, C_out_pad - C_out))).astype(jnp.bfloat16)
    shift_p = jnp.pad(shift, (0, C_out_pad - C_out))[None, :]      # (1, C_out_pad)

    kernel = functools.partial(
        _conv_bn_relu_kernel, KH=KH, KW=KW, sH=sH, sW=sW,
        tH=tH, W_out=W_out, C_in=C_in, C_out_pad=C_out_pad, PW=PW)

    flops = 2 * N * H_out_pad * W_out * KH * KW * C_in * C_out_pad
    bytes_accessed = (xph.size * 2 + wm.size * 2 + shift_p.size * 4
                      + N * H_out_pad * W_out * C_out_pad * 2)

    out = pl.pallas_call(
        kernel,
        out_shape=jax.ShapeDtypeStruct((N, H_out_pad, W_out, C_out_pad),
                                       jnp.bfloat16),
        grid=(N, nH),
        in_specs=[
            # Whole phase-decomposed image; resident across the H-tile axis.
            pl.BlockSpec((P, Hp, Wp, C_in), lambda n, h: (n, 0, 0, 0)),
            # TODO(synk): single-buffer this constant weight block
            # (pipeline_mode=pl.Buffered(1)) to save one weight copy of VMEM.
            pl.BlockSpec((KH * KW * C_in, C_out_pad), lambda n, h: (0, 0)),
            pl.BlockSpec((1, C_out_pad), lambda n, h: (0, 0)),
        ],
        out_specs=pl.BlockSpec((1, tH, W_out, C_out_pad),
                               lambda n, h: (n, h, 0, 0)),
        scratch_shapes=[pltpu.VMEM((tH * W_out, KH * KW * C_in), jnp.bfloat16)],
        compiler_params=pltpu.CompilerParams(
            dimension_semantics=("parallel", "parallel"),
            vmem_limit_bytes=64 * 1024 * 1024),
        cost_estimate=pl.CostEstimate(flops=flops, transcendentals=0,
                                      bytes_accessed=bytes_accessed),
    )(xph, wm, shift_p)

    out = out[:, :H_out, :, :C_out]             # drop H-tile / lane padding
    return jnp.transpose(out, (0, 3, 1, 2))     # back to NCHW (bf16)


def reference_conv_bn_relu(x_nchw, w_oihw, gamma, beta, rmean, rvar,
                           stride, eps=BATCHNORM_EPSILON):
    # Matches the kernel's numerics: BN scale folded into the weight, both conv
    # operands quantized to bf16, f32-accumulated conv, f32 epilogue, bf16 out.
    N, C_in, H, W = x_nchw.shape
    C_out, _, KH, KW = w_oihw.shape
    sH, sW = (stride, stride) if isinstance(stride, int) else stride
    ph0, ph1, _ = _tf_same_pad(H, KH, sH)
    pw0, pw1, _ = _tf_same_pad(W, KW, sW)
    scale = gamma / jnp.sqrt(rvar + eps)
    shift = beta - rmean * scale
    wf = w_oihw.astype(jnp.float32) * scale[:, None, None, None]
    xq = x_nchw.astype(jnp.bfloat16).astype(jnp.float32)
    wq = wf.astype(jnp.bfloat16).astype(jnp.float32)
    y = lax.conv_general_dilated(
        xq, wq, window_strides=(sH, sW), padding=((ph0, ph1), (pw0, pw1)),
        dimension_numbers=('NCHW', 'OIHW', 'NCHW'),
        precision=lax.Precision.HIGHEST)
    y = jnp.maximum(y + shift[None, :, None, None], 0.0)
    return y.astype(jnp.bfloat16)


if __name__ == "__main__":
    # Conv(kernel=3, stride=2, input_dim=4, output_dim=8) on a [2,4,16,16] input
    key = jax.random.PRNGKey(0)
    k_x, k_w, k_g, k_b, k_m, k_v = jax.random.split(key, 6)

    N, C_in, H, W = 2, 4, 16, 16
    C_out, KH, KW = 8, 3, 3
    stride = 2

    x = jax.random.normal(k_x, (N, C_in, H, W), dtype=jnp.float32)
    fan_in = C_in * KH * KW
    w = jax.random.normal(k_w, (C_out, C_in, KH, KW), dtype=jnp.float32) \
        * (1.0 / math.sqrt(fan_in))
    gamma = 1.0 + 0.1 * jax.random.normal(k_g, (C_out,), dtype=jnp.float32)
    beta = 0.1 * jax.random.normal(k_b, (C_out,), dtype=jnp.float32)
    running_mean = 0.1 * jax.random.normal(k_m, (C_out,), dtype=jnp.float32)
    running_var = jax.random.uniform(k_v, (C_out,), dtype=jnp.float32,
                                     minval=0.5, maxval=1.5)

    fn = jax.jit(functools.partial(conv_bn_relu, stride=stride))
    out = jax.block_until_ready(fn(x, w, gamma, beta, running_mean, running_var))

    ref = reference_conv_bn_relu(x, w, gamma, beta, running_mean, running_var,
                                 stride)
    assert out.shape == ref.shape, (out.shape, ref.shape)
    out_f = out.astype(jnp.float32)
    ref_f = ref.astype(jnp.float32)
    rel_err = float(jnp.max(jnp.abs(out_f - ref_f) / (1.0 + jnp.abs(ref_f))))
    assert rel_err < 2e-2, rel_err

    print("KERNEL_OK")
</pallas_src>

<mosaic_0001>
module attributes {stable_mosaic.version = 11 : i64} {
  func.func @_conv_bn_relu_kernel(%arg0: i32, %arg1: i32, %arg2: memref<4x9x9x4xbf16, #tpu.memory_space<vmem>>, %arg3: memref<36x128xbf16, #tpu.memory_space<vmem>>, %arg4: memref<1x128xf32, #tpu.memory_space<vmem>>, %arg5: memref<1x8x8x128xbf16, #tpu.memory_space<vmem>>, %arg6: memref<64x36xbf16, #tpu.memory_space<vmem>>) attributes {dimension_semantics = [#tpu.dimension_semantics<parallel>, #tpu.dimension_semantics<parallel>], iteration_bounds = array<i64: 2, 1>, scalar_prefetch = 0 : i64, scratch_operands = 1 : i64, tpu.core_type = #tpu.core_type<tc>, window_params = [{transform_indices = @transform_0, window_bounds = array<i64: 4, 9, 9, 4>}, {pipeline_mode = #tpu.pipeline_mode<synchronous>, transform_indices = @transform_1, window_bounds = array<i64: 36, 128>}, {pipeline_mode = #tpu.pipeline_mode<synchronous>, transform_indices = @transform_2, window_bounds = array<i64: 1, 128>}, {transform_indices = @transform_3, window_bounds = array<i64: 1, 8, 8, 128>}]} {
    %c8_i32 = arith.constant 8 : i32
    %0 = arith.muli %arg1, %c8_i32 : i32
    %1 = tpu.assume_multiple %0, 8 : i32
    %c0_i32 = arith.constant 0 : i32
    %2 = arith.addi %1, %c0_i32 : i32
    %c0 = arith.constant 0 : index
    %3 = arith.index_cast %2 : i32 to index
    %c0_0 = arith.constant 0 : index
    %c0_1 = arith.constant 0 : index
    %4 = vector.load %arg2[%c0, %3, %c0_0, %c0_1] : memref<4x9x9x4xbf16, #tpu.memory_space<vmem>>, vector<1x8x8x4xbf16>
    %5 = vector.shape_cast %4 : vector<1x8x8x4xbf16> to vector<8x8x4xbf16>
    %6 = vector.shape_cast %5 : vector<8x8x4xbf16> to vector<64x4xbf16>
    %c0_2 = arith.constant 0 : index
    %c0_3 = arith.constant 0 : index
    %7 = vector.load %arg6[%c0_2, %c0_3] : memref<64x36xbf16, #tpu.memory_space<vmem>>, vector<64x4xbf16>
    tpu.vector_store %arg6[%c0_2, %c0_3], %6 {strides = array<i32>} : memref<64x36xbf16, #tpu.memory_space<vmem>>, vector<64x4xbf16>,
    %c0_i32_4 = arith.constant 0 : i32
    %8 = arith.addi %1, %c0_i32_4 : i32
    %c1 = arith.constant 1 : index
    %9 = arith.index_cast %8 : i32 to index
    %c0_5 = arith.constant 0 : index
    %c0_6 = arith.constant 0 : index
    %10 = vector.load %arg2[%c1, %9, %c0_5, %c0_6] : memref<4x9x9x4xbf16, #tpu.memory_space<vmem>>, vector<1x8x8x4xbf16>
    %11 = vector.shape_cast %10 : vector<1x8x8x4xbf16> to vector<8x8x4xbf16>
    %12 = vector.shape_cast %11 : vector<8x8x4xbf16> to vector<64x4xbf16>
    %c0_7 = arith.constant 0 : index
    %c4 = arith.constant 4 : index
    %13 = vector.load %arg6[%c0_7, %c4] : memref<64x36xbf16, #tpu.memory_space<vmem>>, vector<64x4xbf16>
    tpu.vector_store %arg6[%c0_7, %c4], %12 {strides = array<i32>} : memref<64x36xbf16, #tpu.memory_space<vmem>>, vector<64x4xbf16>,
    %c0_i32_8 = arith.constant 0 : i32
    %14 = arith.addi %1, %c0_i32_8 : i32
    %c0_9 = arith.constant 0 : index
    %15 = arith.index_cast %14 : i32 to index
    %c1_10 = arith.constant 1 : index
    %c0_11 = arith.constant 0 : index
    %16 = vector.load %arg2[%c0_9, %15, %c1_10, %c0_11] : memref<4x9x9x4xbf16, #tpu.memory_space<vmem>>, vector<1x8x8x4xbf16>
    %17 = vector.shape_cast %16 : vector<1x8x8x4xbf16> to vector<8x8x4xbf16>
    %18 = vector.shape_cast %17 : vector<8x8x4xbf16> to vector<64x4xbf16>
    %c0_12 = arith.constant 0 : index
    %c8 = arith.constant 8 : index
    %19 = vector.load %arg6[%c0_12, %c8] : memref<64x36xbf16, #tpu.memory_space<vmem>>, vector<64x4xbf16>
    tpu.vector_store %arg6[%c0_12, %c8], %18 {strides = array<i32>} : memref<64x36xbf16, #tpu.memory_space<vmem>>, vector<64x4xbf16>,
    %c0_i32_13 = arith.constant 0 : i32
    %20 = arith.addi %1, %c0_i32_13 : i32
    %c2 = arith.constant 2 : index
    %21 = arith.index_cast %20 : i32 to index
    %c0_14 = arith.constant 0 : index
    %c0_15 = arith.constant 0 : index
    %22 = vector.load %arg2[%c2, %21, %c0_14, %c0_15] : memref<4x9x9x4xbf16, #tpu.memory_space<vmem>>, vector<1x8x8x4xbf16>
    %23 = vector.shape_cast %22 : vector<1x8x8x4xbf16> to vector<8x8x4xbf16>
    %24 = vector.shape_cast %23 : vector<8x8x4xbf16> to vector<64x4xbf16>
    %c0_16 = arith.constant 0 : index
    %c12 = arith.constant 12 : index
    %25 = vector.load %arg6[%c0_16, %c12] : memref<64x36xbf16, #tpu.memory_space<vmem>>, vector<64x4xbf16>
    tpu.vector_store %arg6[%c0_16, %c12], %24 {strides = array<i32>} : memref<64x36xbf16, #tpu.memory_space<vmem>>, vector<64x4xbf16>,
    %c0_i32_17 = arith.constant 0 : i32
    %26 = arith.addi %1, %c0_i32_17 : i32
    %c3 = arith.constant 3 : index
    %27 = arith.index_cast %26 : i32 to index
    %c0_18 = arith.constant 0 : index
    %c0_19 = arith.constant 0 : index
    %28 = vector.load %arg2[%c3, %27, %c0_18, %c0_19] : memref<4x9x9x4xbf16, #tpu.memory_space<vmem>>, vector<1x8x8x4xbf16>
    %29 = vector.shape_cast %28 : vector<1x8x8x4xbf16> to vector<8x8x4xbf16>
    %30 = vector.shape_cast %29 : vector<8x8x4xbf16> to vector<64x4xbf16>
    %c0_20 = arith.constant 0 : index
    %c16 = arith.constant 16 : index
    %31 = vector.load %arg6[%c0_20, %c16] : memref<64x36xbf16, #tpu.memory_space<vmem>>, vector<64x4xbf16>
    tpu.vector_store %arg6[%c0_20, %c16], %30 {strides = array<i32>} : memref<64x36xbf16, #tpu.memory_space<vmem>>, vector<64x4xbf16>,
    %c0_i32_21 = arith.constant 0 : i32
    %32 = arith.addi %1, %c0_i32_21 : i32
    %c2_22 = arith.constant 2 : index
    %33 = arith.index_cast %32 : i32 to index
    %c1_23 = arith.constant 1 : index
    %c0_24 = arith.constant 0 : index
    %34 = vector.load %arg2[%c2_22, %33, %c1_23, %c0_24] : memref<4x9x9x4xbf16, #tpu.memory_space<vmem>>, vector<1x8x8x4xbf16>
    %35 = vector.shape_cast %34 : vector<1x8x8x4xbf16> to vector<8x8x4xbf16>
    %36 = vector.shape_cast %35 : vector<8x8x4xbf16> to vector<64x4xbf16>
    %c0_25 = arith.constant 0 : index
    %c20 = arith.constant 20 : index
    %37 = vector.load %arg6[%c0_25, %c20] : memref<64x36xbf16, #tpu.memory_space<vmem>>, vector<64x4xbf16>
    tpu.vector_store %arg6[%c0_25, %c20], %36 {strides = array<i32>} : memref<64x36xbf16, #tpu.memory_space<vmem>>, vector<64x4xbf16>,
    %c1_i32 = arith.constant 1 : i32
    %38 = arith.addi %1, %c1_i32 : i32
    %c0_26 = arith.constant 0 : index
    %39 = arith.index_cast %38 : i32 to index
    %c0_27 = arith.constant 0 : index
    %c0_28 = arith.constant 0 : index
    %40 = vector.load %arg2[%c0_26, %39, %c0_27, %c0_28] : memref<4x9x9x4xbf16, #tpu.memory_space<vmem>>, vector<1x8x8x4xbf16>
    %41 = vector.shape_cast %40 : vector<1x8x8x4xbf16> to vector<8x8x4xbf16>
    %42 = vector.shape_cast %41 : vector<8x8x4xbf16> to vector<64x4xbf16>
    %c0_29 = arith.constant 0 : index
    %c24 = arith.constant 24 : index
    %43 = vector.load %arg6[%c0_29, %c24] : memref<64x36xbf16, #tpu.memory_space<vmem>>, vector<64x4xbf16>
    tpu.vector_store %arg6[%c0_29, %c24], %42 {strides = array<i32>} : memref<64x36xbf16, #tpu.memory_space<vmem>>, vector<64x4xbf16>,
    %c1_i32_30 = arith.constant 1 : i32
    %44 = arith.addi %1, %c1_i32_30 : i32
    %c1_31 = arith.constant 1 : index
    %45 = arith.index_cast %44 : i32 to index
    %c0_32 = arith.constant 0 : index
    %c0_33 = arith.constant 0 : index
    %46 = vector.load %arg2[%c1_31, %45, %c0_32, %c0_33] : memref<4x9x9x4xbf16, #tpu.memory_space<vmem>>, vector<1x8x8x4xbf16>
    %47 = vector.shape_cast %46 : vector<1x8x8x4xbf16> to vector<8x8x4xbf16>
    %48 = vector.shape_cast %47 : vector<8x8x4xbf16> to vector<64x4xbf16>
    %c0_34 = arith.constant 0 : index
    %c28 = arith.constant 28 : index
    %49 = vector.load %arg6[%c0_34, %c28] : memref<64x36xbf16, #tpu.memory_space<vmem>>, vector<64x4xbf16>
    tpu.vector_store %arg6[%c0_34, %c28], %48 {strides = array<i32>} : memref<64x36xbf16, #tpu.memory_space<vmem>>, vector<64x4xbf16>,
    %c1_i32_35 = arith.constant 1 : i32
    %50 = arith.addi %1, %c1_i32_35 : i32
    %c0_36 = arith.constant 0 : index
    %51 = arith.index_cast %50 : i32 to index
    %c1_37 = arith.constant 1 : index
    %c0_38 = arith.constant 0 : index
    %52 = vector.load %arg2[%c0_36, %51, %c1_37, %c0_38] : memref<4x9x9x4xbf16, #tpu.memory_space<vmem>>, vector<1x8x8x4xbf16>
    %53 = vector.shape_cast %52 : vector<1x8x8x4xbf16> to vector<8x8x4xbf16>
    %54 = vector.shape_cast %53 : vector<8x8x4xbf16> to vector<64x4xbf16>
    %c0_39 = arith.constant 0 : index
    %c32 = arith.constant 32 : index
    %55 = vector.load %arg6[%c0_39, %c32] : memref<64x36xbf16, #tpu.memory_space<vmem>>, vector<64x4xbf16>
    tpu.vector_store %arg6[%c0_39, %c32], %54 {strides = array<i32>} : memref<64x36xbf16, #tpu.memory_space<vmem>>, vector<64x4xbf16>,
    %c0_40 = arith.constant 0 : index
    %c0_41 = arith.constant 0 : index
    %56 = vector.load %arg6[%c0_40, %c0_41] : memref<64x36xbf16, #tpu.memory_space<vmem>>, vector<64x36xbf16>
    %c0_42 = arith.constant 0 : index
    %c0_43 = arith.constant 0 : index
    %57 = vector.load %arg3[%c0_42, %c0_43] : memref<36x128xbf16, #tpu.memory_space<vmem>>, vector<36x128xbf16>
    %cst = arith.constant dense<0.000000e+00> : vector<64x128xf32>
    %58 = tpu.matmul %56, %57, %cst {dimension_numbers = #tpu.dot_dimension_numbers<[1], [0], [0], [1], [0, 0, 1, 1], [], []>} : vector<64x36xbf16>, vector<36x128xbf16>, vector<64x128xf32> -> vector<64x128xf32>
    %c0_44 = arith.constant 0 : index
    %c0_45 = arith.constant 0 : index
    %59 = vector.load %arg4[%c0_44, %c0_45] : memref<1x128xf32, #tpu.memory_space<vmem>>, vector<1x128xf32>
    %60 = vector.broadcast %59 : vector<1x128xf32> to vector<64x128xf32>
    %61 = arith.addf %58, %60 : vector<64x128xf32>
    %cst_46 = arith.constant 0.000000e+00 : f32
    %62 = vector.broadcast %cst_46 : f32 to vector<64x128xf32>
    %63 = arith.maximumf %61, %62 : vector<64x128xf32>
    %64 = vector.shape_cast %63 : vector<64x128xf32> to vector<8x8x128xf32>
    %65 = arith.truncf %64 : vector<8x8x128xf32> to vector<8x8x128xbf16>
    %c0_47 = arith.constant 0 : index
    %c0_48 = arith.constant 0 : index
    %c0_49 = arith.constant 0 : index
    %c0_50 = arith.constant 0 : index
    %66 = vector.load %arg5[%c0_47, %c0_48, %c0_49, %c0_50] : memref<1x8x8x128xbf16, #tpu.memory_space<vmem>>, vector<1x8x8x128xbf16>
    %67 = vector.shape_cast %66 : vector<1x8x8x128xbf16> to vector<8x8x128xbf16>
    %68 = vector.shape_cast %65 : vector<8x8x128xbf16> to vector<1x8x8x128xbf16>
    tpu.vector_store %arg5[%c0_47, %c0_48, %c0_49, %c0_50], %68 {strides = array<i32>} : memref<1x8x8x128xbf16, #tpu.memory_space<vmem>>, vector<1x8x8x128xbf16>,
    return
  }
  func.func @transform_0(%arg0: i32, %arg1: i32) -> (i32, i32, i32, i32) {
    %c0_i32 = arith.constant 0 : i32
    %c0_i32_0 = arith.constant 0 : i32
    %c0_i32_1 = arith.constant 0 : i32
    %c0_i32_2 = arith.constant 0 : i32
    return %arg0, %c0_i32, %c0_i32_0, %c0_i32_1 : i32, i32, i32, i32
  }
  func.func @transform_1(%arg0: i32, %arg1: i32) -> (i32, i32) {
    %c0_i32 = arith.constant 0 : i32
    %c0_i32_0 = arith.constant 0 : i32
    %c0_i32_1 = arith.constant 0 : i32
    return %c0_i32, %c0_i32_0 : i32, i32
  }
  func.func @transform_2(%arg0: i32, %arg1: i32) -> (i32, i32) {
    %c0_i32 = arith.constant 0 : i32
    %c0_i32_0 = arith.constant 0 : i32
    %c0_i32_1 = arith.constant 0 : i32
    return %c0_i32, %c0_i32_0 : i32, i32
  }
  func.func @transform_3(%arg0: i32, %arg1: i32) -> (i32, i32, i32, i32) {
    %c0_i32 = arith.constant 0 : i32
    %c0_i32_0 = arith.constant 0 : i32
    %c0_i32_1 = arith.constant 0 : i32
    return %arg0, %arg1, %c0_i32, %c0_i32_0 : i32, i32, i32, i32
  }
}

</mosaic_0001>

<llo_original>
// kernel: conv_bn_relu.1
$region0: #{conv_bn_relu.1}
  #allocation0 [shape = 'u32[]', space=smem, size = 0x4, offset = 0x4, fixed_abs, tag = 'smem constant byte address 0x4 - core index']
  #allocation1 [shape = 'u32[72,128]{1,0:T(1,128)}', space=vmem, size = 0x9000, scoped, tag = 'internal scratch']
  #allocation2 [shape = 'bf16[64,36]{1,0:T(8,128)(2,1)}', space=vmem, size = 0x4000, scoped, tag = 'scratch operand']
  %s0 = inlined_call_operand.vmem [shape: bf16[8,9,9,4], index: 0, kind: input, shape index: {}]
  %s1 = inlined_call_operand.vmem [shape: bf16[36,128], index: 1, kind: input, shape index: {}]
  %s2 = inlined_call_operand.vmem [shape: f32[1,128], index: 2, kind: input, shape index: {}]
  %s3 = inlined_call_operand.vmem [shape: bf16[2,8,8,128], index: 3, kind: output, shape index: {}]
  %s4 = sld [smem:[#allocation0]]
  $region45: #{conv_bn_relu.1} parent=0
    _
  %s6 = ssub.s32 1, %s4
  %s7 = scalar_select 0, %s6, %s4
  loop: start=0, step=1, limit=4
  $region2: #{conv_bn_relu.1} parent=0 // loop_pre_header
    _
  $region3: #{conv_bn_relu.1} parent=0 // loop_header
    %s9 = sphi 0, %s13
    %p10 = scmp.ge.s32.totalorder %s9, 4
    %s16 = sphi 0, %s28
    %s17 = sphi 0, %s24
    %s18 = sphi 0, %s16
    %s19 = sphi 0, %s17
    %s20 = sphi 0, %s18
    %s21 = sphi 0, %s19
    %s31 = sphi 0, %s33
    %s34 = sphi 0, %s31
    %s35 = sphi 0, %s34
    %s51 = sphi 0, %s35
    %s55 = sphi 0, %s55
    %s57 = sphi 0, %s55
    %s58 = sphi 0, %s57
    %s72 = sphi 0, %s58
    %s76 = sphi 0, %s76
    %s78 = sphi 0, %s76
    %s79 = sphi 0, %s78
    %s93 = sphi 0, %s79
    %s101 = sphi 0, %s103
    %s104 = sphi 0, %s101
    %s105 = sphi 0, %s104
    %s121 = sphi 0, %s105
  $region4: #{conv_bn_relu.1} parent=0 // loop_header_branch
    %12 = sbr.rel (%p10) target = $region8
  $region5: #{conv_bn_relu.1} parent=0 // loop_body
    %s14 = ssub.s32 %s9, 1
    %s15 = ssub.s32 %s9, 2
    %s22 = sadd.s32 1, %s17
    %p23 = scmp.ge.s32.totalorder %s22, 1
    %s24 = scalar_select %p23, 0, %s22
    %s25 = sadd.s32 1, %s16
    %s26 = scalar_select %p23, %s25, %s16
    %p27 = scmp.ge.s32.totalorder %s26, 2
    %s28 = scalar_select %p27, 0, %s26
    %s29 = ssub.s32 %s16, %s28
    %p30 = scmp.eq.s32.totalorder %s29, 0
    %s32 = sadd.s32 %s31, 1
    %s33 = scalar_select %p30, %s31, %s32
    %p36 = pneg %p30
    %p37 = scmp.eq.s32.totalorder %s9, 1
    %p38 = por %p36, %p37
    %p39 = scmp.ne.s32.totalorder %s31, %s34
    %p40 = scmp.eq.s32.totalorder %s9, 0
    %p41 = por %p39, %p40
    %p42 = scmp.ne.s32.totalorder %s31, %s34
    %p43 = scmp.eq.s32.totalorder %s14, 1
    %p44 = por %p42, %p43
    %p45 = scmp.ne.s32.totalorder %s34, %s35
    %p46 = scmp.eq.s32.totalorder %s14, 0
    %p47 = por %p45, %p46
    %p48 = scmp.ne.s32.totalorder %s34, %s35
    %p49 = scmp.eq.s32.totalorder %s15, 1
    %p50 = por %p48, %p49
    %p52 = scmp.ne.s32.totalorder %s35, %s51
    %p53 = scmp.eq.s32.totalorder %s15, 0
    %p54 = por %p52, %p53
    %s56 = sadd.s32 %s55, 1
    %p59 = scmp.eq.s32.totalorder %s9, 1
    %p60 = scmp.ne.s32.totalorder %s55, %s57
    %p61 = scmp.eq.s32.totalorder %s9, 0
    %p62 = por %p60, %p61
    %p63 = scmp.ne.s32.totalorder %s55, %s57
    %p64 = scmp.eq.s32.totalorder %s14, 1
    %p65 = por %p63, %p64
    %p66 = scmp.ne.s32.totalorder %s57, %s58
    %p67 = scmp.eq.s32.totalorder %s14, 0
    %p68 = por %p66, %p67
    %p69 = scmp.ne.s32.totalorder %s57, %s58
    %p70 = scmp.eq.s32.totalorder %s15, 1
    %p71 = por %p69, %p70
    %p73 = scmp.ne.s32.totalorder %s58, %s72
    %p74 = scmp.eq.s32.totalorder %s15, 0
    %p75 = por %p73, %p74
    %s77 = sadd.s32 %s76, 1
    %p80 = scmp.eq.s32.totalorder %s9, 1
    %p81 = scmp.ne.s32.totalorder %s76, %s78
    %p82 = scmp.eq.s32.totalorder %s9, 0
    %p83 = por %p81, %p82
    %p84 = scmp.ne.s32.totalorder %s76, %s78
    %p85 = scmp.eq.s32.totalorder %s14, 1
    %p86 = por %p84, %p85
    %p87 = scmp.ne.s32.totalorder %s78, %s79
    %p88 = scmp.eq.s32.totalorder %s14, 0
    %p89 = por %p87, %p88
    %p90 = scmp.ne.s32.totalorder %s78, %s79
    %p91 = scmp.eq.s32.totalorder %s15, 1
    %p92 = por %p90, %p91
    %p94 = scmp.ne.s32.totalorder %s79, %s93
    %p95 = scmp.eq.s32.totalorder %s15, 0
    %p96 = por %p94, %p95
    %s97 = ssub.s32 %s16, %s28
    %s98 = ssub.s32 %s17, %s24
    %s99 = sor.u32 %s97, %s98
    %p100 = scmp.eq.s32.totalorder %s99, 0
    %s102 = sadd.s32 %s101, 1
    %s103 = scalar_select %p100, %s101, %s102
    %p106 = pneg %p100
    %p107 = scmp.eq.s32.totalorder %s9, 1
    %p108 = por %p106, %p107
    %p109 = scmp.ne.s32.totalorder %s101, %s104
    %p110 = scmp.eq.s32.totalorder %s9, 0
    %p111 = por %p109, %p110
    %p112 = scmp.ne.s32.totalorder %s101, %s104
    %p113 = scmp.eq.s32.totalorder %s14, 1
    %p114 = por %p112, %p113
    %p115 = scmp.ne.s32.totalorder %s104, %s105
    %p116 = scmp.eq.s32.totalorder %s14, 0
    %p117 = por %p115, %p116
    %p118 = scmp.ne.s32.totalorder %s104, %s105
    %p119 = scmp.eq.s32.totalorder %s15, 1
    %p120 = por %p118, %p119
    %p122 = scmp.ne.s32.totalorder %s105, %s121
    %p123 = scmp.eq.s32.totalorder %s15, 0
    %p124 = por %p122, %p123
    %p125 = scmp.le.s32.totalorder 1, %s9
    %p126 = scmp.lt.s32.totalorder %s9, 3
    %p127 = pnand %p125, %p126
    %p128 = pneg %p127
    // Predicated region
    $region9: #{conv_bn_relu.1} parent=5 // pred_check
      _
    $region10: #{conv_bn_relu.1} parent=5 // pred_check_branch
      %130 = sbr.rel (%p127) target = $region12
    $region11: #{conv_bn_relu.1} parent=5 // pred_region
      %s131 = ssub.s32 %s9, 1
      // Predicated region
      $region13: #{conv_bn_relu.1} parent=11 // pred_check
        %p132 = pneg %p68
      $region14: #{conv_bn_relu.1} parent=11 // pred_check_branch
        %134 = sbr.rel (%p132) target = $region16
      $region15: #{conv_bn_relu.1} parent=11 // pred_region
        _
      $region16: #{conv_bn_relu.1} parent=11 // pred_fallthru
        _
      // Predicated region
      $region17: #{conv_bn_relu.1} parent=11 // pred_check
        %p135 = pneg %p89
      $region18: #{conv_bn_relu.1} parent=11 // pred_check_branch
        %137 = sbr.rel (%p135) target = $region20
      $region19: #{conv_bn_relu.1} parent=11 // pred_region
        _
      $region20: #{conv_bn_relu.1} parent=11 // pred_fallthru
        _
    $region12: #{conv_bn_relu.1} parent=5 // pred_fallthru
      _
    %p138 = scmp.lt.s32.totalorder %s9, 2
    // Predicated region
    $region21: #{conv_bn_relu.1} parent=5 // pred_check
      %p139 = pneg %p138
    $region22: #{conv_bn_relu.1} parent=5 // pred_check_branch
      %141 = sbr.rel (%p139) target = $region24
    $region23: #{conv_bn_relu.1} parent=5 // pred_region
      // Predicated region
      $region25: #{conv_bn_relu.1} parent=23 // pred_check
        %p142 = pneg %p41
      $region26: #{conv_bn_relu.1} parent=23 // pred_check_branch
        %144 = sbr.rel (%p142) target = $region28
      $region27: #{conv_bn_relu.1} parent=23 // pred_region
        %s145 = smul.u32 4, %s16
        %p146 = scmp.lt.s32.totalorder %s145, 7
        %s147 = scalar_select %p146, %s145, 7
        %s148 = smul.addr %s147, 18
        %s149 = smul.addr %s148, 4
        %s150 = scalar_lea.vmem %s0, %s149
        %s151 = smul.u32 4, %s16
      $region28: #{conv_bn_relu.1} parent=23 // pred_fallthru
        _
    $region24: #{conv_bn_relu.1} parent=5 // pred_fallthru
      _
    %p152 = scmp.le.s32.totalorder 1, %s9
    %p153 = scmp.lt.s32.totalorder %s9, 3
    %p154 = pnand %p152, %p153
    %p155 = pneg %p154
    // Predicated region
    $region29: #{conv_bn_relu.1} parent=5 // pred_check
      _
    $region30: #{conv_bn_relu.1} parent=5 // pred_check_branch
      %157 = sbr.rel (%p154) target = $region32
    $region31: #{conv_bn_relu.1} parent=5 // pred_region
      %s158 = ssub.s32 %s9, 1
      %s159 = smul.u32 4, %s18
      %p160 = scmp.lt.s32.totalorder %s159, 7
      %s161 = scalar_select %p160, %s159, 7
      %s162 = smul.addr %s161, 18
      %s163 = smul.addr %s162, 4
      %s164 = scalar_lea.vmem %s0, %s163
      %p165 = pneg %p47
      %p166 = pneg %p44
      %p167 = pneg %p68
      %p168 = pneg %p65
      %p169 = pneg %p89
      %p170 = pneg %p86
      %p171 = pneg %p117
      %p172 = pneg %p114
      %s173 = smul.u32 8, %s19
      %p174 = scmp.lt.s32.totalorder %s18, 1
      %s175 = scalar_select %p174, %s18, 1
      %p176 = scmp.lt.s32.totalorder %s173, 7
      %s177 = scalar_select %p176, %s173, 7
      %s178 = smul.addr %s175, 8
      %s179 = sadd.s32 %s177, %s178
      %s180 = smul.addr %s179, 4
      %s181 = scalar_lea.vmem %s3, %s180
      %s182 = smul.u32 4, %s18
      %p183 = scmp.lt.s32.totalorder %s182, 7
      %s184 = scalar_select %p183, %s182, 7
      %s185 = smul.addr %s184, 18
      %s186 = smul.addr %s185, 4
      %s187 = scalar_lea.vmem %s0, %s186
      %s188 = smul.u32 4, %s18
      %s189 = smul.u32 8, %s19
      %p190 = scmp.lt.s32.totalorder %s18, 1
      %s191 = scalar_select %p190, %s18, 1
      %p192 = scmp.lt.s32.totalorder %s189, 7
      %s193 = scalar_select %p192, %s189, 7
      %s194 = smul.addr %s191, 8
      %s195 = sadd.s32 %s193, %s194
      %s196 = smul.addr %s195, 4
      %s197 = scalar_lea.vmem %s3, %s196
      %s198 = smul.u32 8, %s19
      %s200 = smul.u32 %s19, 8
      %s201 = smul.u32 %s200, 2
      %s202 = smul.addr %s201, 4
      %s203 = scalar_lea.vmem %s187, %s202
      %v204 = vld [vmem:[%s203] sm:$0xf]
      %v205 = vld [vmem:[%s203 + $0x8] sm:$0xf]
      %v206 = vld [vmem:[%s203 + $0x10] sm:$0xf]
      %v207 = vld [vmem:[%s203 + $0x18] sm:$0xf]
      %v208 = vld [vmem:[%s203 + $0x20] sm:$0xf]
      %v209 = vld [vmem:[%s203 + $0x28] sm:$0xf]
      %v210 = vld [vmem:[%s203 + $0x30] sm:$0xf]
      %v211 = vld [vmem:[%s203 + $0x38] sm:$0xf]
      %vm212 = vcmask 27648
      %213 = vst.msk [vmem:[#allocation2] sm:$0xf] %vm212, %v204
      %214 = vst.msk [vmem:[#allocation2 + $0x4] sm:$0xf] %vm212, %v205
      %215 = vst.msk [vmem:[#allocation2 + $0x8] sm:$0xf] %vm212, %v206
      %216 = vst.msk [vmem:[#allocation2 + $0xc] sm:$0xf] %vm212, %v207
      %217 = vst.msk [vmem:[#allocation2 + $0x10] sm:$0xf] %vm212, %v208
      %218 = vst.msk [vmem:[#allocation2 + $0x14] sm:$0xf] %vm212, %v209
      %219 = vst.msk [vmem:[#allocation2 + $0x18] sm:$0xf] %vm212, %v210
      %220 = vst.msk [vmem:[#allocation2 + $0x1c] sm:$0xf] %vm212, %v211
      %s221 = sadd.s32 %s201, 18
      %s222 = smul.addr %s221, 4
      %s223 = scalar_lea.vmem %s187, %s222
      %v224 = vld [vmem:[%s223] sm:$0xf]
      %v225 = vld [vmem:[%s223 + $0x8] sm:$0xf]
      %v226 = vld [vmem:[%s223 + $0x10] sm:$0xf]
      %v227 = vld [vmem:[%s223 + $0x18] sm:$0xf]
      %v228 = vld [vmem:[%s223 + $0x20] sm:$0xf]
      %v229 = vld [vmem:[%s223 + $0x28] sm:$0xf]
      %v230 = vld [vmem:[%s223 + $0x30] sm:$0xf]
      %v231 = vld [vmem:[%s223 + $0x38] sm:$0xf]
      %240 = vrot.lane.b32.xlu0 %v224, 4
      %v241 = vpop.permute.xlu0 %240
      %242 = vrot.lane.b32.xlu0 %v225, 4
      %v243 = vpop.permute.xlu0 %242
      %244 = vrot.lane.b32.xlu0 %v226, 4
      %v245 = vpop.permute.xlu0 %244
      %246 = vrot.lane.b32.xlu0 %v227, 4
      %v247 = vpop.permute.xlu0 %246
      %248 = vrot.lane.b32.xlu0 %v228, 4
      %v249 = vpop.permute.xlu0 %248
      %250 = vrot.lane.b32.xlu0 %v229, 4
      %v251 = vpop.permute.xlu0 %250
      %252 = vrot.lane.b32.xlu0 %v230, 4
      %v253 = vpop.permute.xlu0 %252
      %254 = vrot.lane.b32.xlu0 %v231, 4
      %v255 = vpop.permute.xlu0 %254
      %vm264 = vcmask 60448
      %265 = vst.msk [vmem:[#allocation2] sm:$0xf] %vm264, %v241
      %266 = vst.msk [vmem:[#allocation2 + $0x4] sm:$0xf] %vm264, %v243
      %267 = vst.msk [vmem:[#allocation2 + $0x8] sm:$0xf] %vm264, %v245
      %268 = vst.msk [vmem:[#allocation2 + $0xc] sm:$0xf] %vm264, %v247
      %269 = vst.msk [vmem:[#allocation2 + $0x10] sm:$0xf] %vm264, %v249
      %270 = vst.msk [vmem:[#allocation2 + $0x14] sm:$0xf] %vm264, %v251
      %271 = vst.msk [vmem:[#allocation2 + $0x18] sm:$0xf] %vm264, %v253
      %272 = vst.msk [vmem:[#allocation2 + $0x1c] sm:$0xf] %vm264, %v255
      %v273 = vld [vmem:[%s203] sm:$0xf]
      %v274 = vld [vmem:[%s203 + $0x4] sm:$0x1]
      %v275 = vld [vmem:[%s203 + $0x8] sm:$0xf]
      %v276 = vld [vmem:[%s203 + $0xc] sm:$0x1]
      %v277 = vld [vmem:[%s203 + $0x10] sm:$0xf]
      %v278 = vld [vmem:[%s203 + $0x14] sm:$0x1]
      %v279 = vld [vmem:[%s203 + $0x18] sm:$0xf]
      %v280 = vld [vmem:[%s203 + $0x1c] sm:$0x1]
      %v281 = vld [vmem:[%s203 + $0x20] sm:$0xf]
      %v282 = vld [vmem:[%s203 + $0x24] sm:$0x1]
      %v283 = vld [vmem:[%s203 + $0x28] sm:$0xf]
      %v284 = vld [vmem:[%s203 + $0x2c] sm:$0x1]
      %v285 = vld [vmem:[%s203 + $0x30] sm:$0xf]
      %v286 = vld [vmem:[%s203 + $0x34] sm:$0x1]
      %v287 = vld [vmem:[%s203 + $0x38] sm:$0xf]
      %v288 = vld [vmem:[%s203 + $0x3c] sm:$0x1]
      %vm289 = vsmask.f32 3328
      %vm290 = vsmask.f32 7440
      %vm291 = vmor %vm289, %vm290
      %v293 = vshrl.u32 %v273, 16
      %v295 = vrot.slane %v293, 4
      %v296 = vshll.u32 %v273, 16
      %v298 = vrot.slane %v296, 5
      %v299 = vor.u32 %v295, %v298
      %v300 = vrot.slane %v299, 4
      %v302 = vshll.u32 %v274, 16
      %v304 = vrot.slane %v302, 5
      %v305 = vsel %vm291, %v300, %v304
      %v307 = vshrl.u32 %v275, 16
      %v309 = vrot.slane %v307, 4
      %v310 = vshll.u32 %v275, 16
      %v312 = vrot.slane %v310, 5
      %v313 = vor.u32 %v309, %v312
      %v314 = vrot.slane %v313, 4
      %v316 = vshll.u32 %v276, 16
      %v318 = vrot.slane %v316, 5
      %v319 = vsel %vm291, %v314, %v318
      %v321 = vshrl.u32 %v277, 16
      %v323 = vrot.slane %v321, 4
      %v324 = vshll.u32 %v277, 16
      %v326 = vrot.slane %v324, 5
      %v327 = vor.u32 %v323, %v326
      %v328 = vrot.slane %v327, 4
      %v330 = vshll.u32 %v278, 16
      %v332 = vrot.slane %v330, 5
      %v333 = vsel %vm291, %v328, %v332
      %v335 = vshrl.u32 %v279, 16
      %v337 = vrot.slane %v335, 4
      %v338 = vshll.u32 %v279, 16
      %v340 = vrot.slane %v338, 5
      %v341 = vor.u32 %v337, %v340
      %v342 = vrot.slane %v341, 4
      %v344 = vshll.u32 %v280, 16
      %v346 = vrot.slane %v344, 5
      %v347 = vsel %vm291, %v342, %v346
      %v349 = vshrl.u32 %v281, 16
      %v351 = vrot.slane %v349, 4
      %v352 = vshll.u32 %v281, 16
      %v354 = vrot.slane %v352, 5
      %v355 = vor.u32 %v351, %v354
      %v356 = vrot.slane %v355, 4
      %v358 = vshll.u32 %v282, 16
      %v360 = vrot.slane %v358, 5
      %v361 = vsel %vm291, %v356, %v360
      %v363 = vshrl.u32 %v283, 16
      %v365 = vrot.slane %v363, 4
      %v366 = vshll.u32 %v283, 16
      %v368 = vrot.slane %v366, 5
      %v369 = vor.u32 %v365, %v368
      %v370 = vrot.slane %v369, 4
      %v372 = vshll.u32 %v284, 16
      %v374 = vrot.slane %v372, 5
      %v375 = vsel %vm291, %v370, %v374
      %v377 = vshrl.u32 %v285, 16
      %v379 = vrot.slane %v377, 4
      %v380 = vshll.u32 %v285, 16
      %v382 = vrot.slane %v380, 5
      %v383 = vor.u32 %v379, %v382
      %v384 = vrot.slane %v383, 4
      %v386 = vshll.u32 %v286, 16
      %v388 = vrot.slane %v386, 5
      %v389 = vsel %vm291, %v384, %v388
      %v391 = vshrl.u32 %v287, 16
      %v393 = vrot.slane %v391, 4
      %v394 = vshll.u32 %v287, 16
      %v396 = vrot.slane %v394, 5
      %v397 = vor.u32 %v393, %v396
      %v398 = vrot.slane %v397, 4
      %v400 = vshll.u32 %v288, 16
      %v402 = vrot.slane %v400, 5
      %v403 = vsel %vm291, %v398, %v402
      %404 = vrot.lane.b32.xlu0 %v305, 8
      %v405 = vpop.permute.xlu0 %404
      %406 = vrot.lane.b32.xlu0 %v319, 8
      %v407 = vpop.permute.xlu0 %406
      %408 = vrot.lane.b32.xlu0 %v333, 8
      %v409 = vpop.permute.xlu0 %408
      %410 = vrot.lane.b32.xlu0 %v347, 8
      %v411 = vpop.permute.xlu0 %410
      %412 = vrot.lane.b32.xlu0 %v361, 8
      %v413 = vpop.permute.xlu0 %412
      %414 = vrot.lane.b32.xlu0 %v375, 8
      %v415 = vpop.permute.xlu0 %414
      %416 = vrot.lane.b32.xlu0 %v389, 8
      %v417 = vpop.permute.xlu0 %416
      %418 = vrot.lane.b32.xlu0 %v403, 8
      %v419 = vpop.permute.xlu0 %418
      %vm428 = vcmask 93248
      %429 = vst.msk [vmem:[#allocation2] sm:$0xf] %vm428, %v405
      %430 = vst.msk [vmem:[#allocation2 + $0x4] sm:$0xf] %vm428, %v407
      %431 = vst.msk [vmem:[#allocation2 + $0x8] sm:$0xf] %vm428, %v409
      %432 = vst.msk [vmem:[#allocation2 + $0xc] sm:$0xf] %vm428, %v411
      %433 = vst.msk [vmem:[#allocation2 + $0x10] sm:$0xf] %vm428, %v413
      %434 = vst.msk [vmem:[#allocation2 + $0x14] sm:$0xf] %vm428, %v415
      %435 = vst.msk [vmem:[#allocation2 + $0x18] sm:$0xf] %vm428, %v417
      %436 = vst.msk [vmem:[#allocation2 + $0x1c] sm:$0xf] %vm428, %v419
      %s437 = sadd.s32 %s201, 36
      %s438 = smul.addr %s437, 4
      %s439 = scalar_lea.vmem %s187, %s438
      %v440 = vld [vmem:[%s439] sm:$0xf]
      %v441 = vld [vmem:[%s439 + $0x8] sm:$0xf]
      %v442 = vld [vmem:[%s439 + $0x10] sm:$0xf]
      %v443 = vld [vmem:[%s439 + $0x18] sm:$0xf]
      %v444 = vld [vmem:[%s439 + $0x20] sm:$0xf]
      %v445 = vld [vmem:[%s439 + $0x28] sm:$0xf]
      %v446 = vld [vmem:[%s439 + $0x30] sm:$0xf]
      %v447 = vld [vmem:[%s439 + $0x38] sm:$0xf]
      %456 = vrot.lane.b32.xlu0 %v440, 12
      %v457 = vpop.permute.xlu0 %456
      %458 = vrot.lane.b32.xlu0 %v441, 12
      %v459 = vpop.permute.xlu0 %458
      %460 = vrot.lane.b32.xlu0 %v442, 12
      %v461 = vpop.permute.xlu0 %460
      %462 = vrot.lane.b32.xlu0 %v443, 12
      %v463 = vpop.permute.xlu0 %462
      %464 = vrot.lane.b32.xlu0 %v444, 12
      %v465 = vpop.permute.xlu0 %464
      %466 = vrot.lane.b32.xlu0 %v445, 12
      %v467 = vpop.permute.xlu0 %466
      %468 = vrot.lane.b32.xlu0 %v446, 12
      %v469 = vpop.permute.xlu0 %468
      %470 = vrot.lane.b32.xlu0 %v447, 12
      %v471 = vpop.permute.xlu0 %470
      %vm480 = vcmask 126048
      %481 = vst.msk [vmem:[#allocation2] sm:$0xf] %vm480, %v457
      %482 = vst.msk [vmem:[#allocation2 + $0x4] sm:$0xf] %vm480, %v459
      %483 = vst.msk [vmem:[#allocation2 + $0x8] sm:$0xf] %vm480, %v461
      %484 = vst.msk [vmem:[#allocation2 + $0xc] sm:$0xf] %vm480, %v463
      %485 = vst.msk [vmem:[#allocation2 + $0x10] sm:$0xf] %vm480, %v465
      %486 = vst.msk [vmem:[#allocation2 + $0x14] sm:$0xf] %vm480, %v467
      %487 = vst.msk [vmem:[#allocation2 + $0x18] sm:$0xf] %vm480, %v469
      %488 = vst.msk [vmem:[#allocation2 + $0x1c] sm:$0xf] %vm480, %v471
      %s489 = sadd.s32 %s201, 54
      %s490 = smul.addr %s489, 4
      %s491 = scalar_lea.vmem %s187, %s490
      %v492 = vld [vmem:[%s491] sm:$0xf]
      %v493 = vld [vmem:[%s491 + $0x8] sm:$0xf]
      %v494 = vld [vmem:[%s491 + $0x10] sm:$0xf]
      %v495 = vld [vmem:[%s491 + $0x18] sm:$0xf]
      %v496 = vld [vmem:[%s491 + $0x20] sm:$0xf]
      %v497 = vld [vmem:[%s491 + $0x28] sm:$0xf]
      %v498 = vld [vmem:[%s491 + $0x30] sm:$0xf]
      %v499 = vld [vmem:[%s491 + $0x38] sm:$0xf]
      %508 = vrot.lane.b32.xlu0 %v492, 16
      %v509 = vpop.permute.xlu0 %508
      %510 = vrot.lane.b32.xlu0 %v493, 16
      %v511 = vpop.permute.xlu0 %510
      %512 = vrot.lane.b32.xlu0 %v494, 16
      %v513 = vpop.permute.xlu0 %512
      %514 = vrot.lane.b32.xlu0 %v495, 16
      %v515 = vpop.permute.xlu0 %514
      %516 = vrot.lane.b32.xlu0 %v496, 16
      %v517 = vpop.permute.xlu0 %516
      %518 = vrot.lane.b32.xlu0 %v497, 16
      %v519 = vpop.permute.xlu0 %518
      %520 = vrot.lane.b32.xlu0 %v498, 16
      %v521 = vpop.permute.xlu0 %520
      %522 = vrot.lane.b32.xlu0 %v499, 16
      %v523 = vpop.permute.xlu0 %522
      %vm532 = vcmask 158848
      %533 = vst.msk [vmem:[#allocation2] sm:$0xf] %vm532, %v509
      %534 = vst.msk [vmem:[#allocation2 + $0x4] sm:$0xf] %vm532, %v511
      %535 = vst.msk [vmem:[#allocation2 + $0x8] sm:$0xf] %vm532, %v513
      %536 = vst.msk [vmem:[#allocation2 + $0xc] sm:$0xf] %vm532, %v515
      %537 = vst.msk [vmem:[#allocation2 + $0x10] sm:$0xf] %vm532, %v517
      %538 = vst.msk [vmem:[#allocation2 + $0x14] sm:$0xf] %vm532, %v519
      %539 = vst.msk [vmem:[#allocation2 + $0x18] sm:$0xf] %vm532, %v521
      %540 = vst.msk [vmem:[#allocation2 + $0x1c] sm:$0xf] %vm532, %v523
      %v541 = vld [vmem:[%s439] sm:$0xf]
      %v542 = vld [vmem:[%s439 + $0x4] sm:$0x1]
      %v543 = vld [vmem:[%s439 + $0x8] sm:$0xf]
      %v544 = vld [vmem:[%s439 + $0xc] sm:$0x1]
      %v545 = vld [vmem:[%s439 + $0x10] sm:$0xf]
      %v546 = vld [vmem:[%s439 + $0x14] sm:$0x1]
      %v547 = vld [vmem:[%s439 + $0x18] sm:$0xf]
      %v548 = vld [vmem:[%s439 + $0x1c] sm:$0x1]
      %v549 = vld [vmem:[%s439 + $0x20] sm:$0xf]
      %v550 = vld [vmem:[%s439 + $0x24] sm:$0x1]
      %v551 = vld [vmem:[%s439 + $0x28] sm:$0xf]
      %v552 = vld [vmem:[%s439 + $0x2c] sm:$0x1]
      %v553 = vld [vmem:[%s439 + $0x30] sm:$0xf]
      %v554 = vld [vmem:[%s439 + $0x34] sm:$0x1]
      %v555 = vld [vmem:[%s439 + $0x38] sm:$0xf]
      %v556 = vld [vmem:[%s439 + $0x3c] sm:$0x1]
      %v558 = vshrl.u32 %v541, 16
      %v560 = vrot.slane %v558, 4
      %v561 = vshll.u32 %v541, 16
      %v563 = vrot.slane %v561, 5
      %v564 = vor.u32 %v560, %v563
      %v565 = vrot.slane %v564, 4
      %v567 = vshll.u32 %v542, 16
      %v569 = vrot.slane %v567, 5
      %v570 = vsel %vm291, %v565, %v569
      %v572 = vshrl.u32 %v543, 16
      %v574 = vrot.slane %v572, 4
      %v575 = vshll.u32 %v543, 16
      %v577 = vrot.slane %v575, 5
      %v578 = vor.u32 %v574, %v577
      %v579 = vrot.slane %v578, 4
      %v581 = vshll.u32 %v544, 16
      %v583 = vrot.slane %v581, 5
      %v584 = vsel %vm291, %v579, %v583
      %v586 = vshrl.u32 %v545, 16
      %v588 = vrot.slane %v586, 4
      %v589 = vshll.u32 %v545, 16
      %v591 = vrot.slane %v589, 5
      %v592 = vor.u32 %v588, %v591
      %v593 = vrot.slane %v592, 4
      %v595 = vshll.u32 %v546, 16
      %v597 = vrot.slane %v595, 5
      %v598 = vsel %vm291, %v593, %v597
      %v600 = vshrl.u32 %v547, 16
      %v602 = vrot.slane %v600, 4
      %v603 = vshll.u32 %v547, 16
      %v605 = vrot.slane %v603, 5
      %v606 = vor.u32 %v602, %v605
      %v607 = vrot.slane %v606, 4
      %v609 = vshll.u32 %v548, 16
      %v611 = vrot.slane %v609, 5
      %v612 = vsel %vm291, %v607, %v611
      %v614 = vshrl.u32 %v549, 16
      %v616 = vrot.slane %v614, 4
      %v617 = vshll.u32 %v549, 16
      %v619 = vrot.slane %v617, 5
      %v620 = vor.u32 %v616, %v619
      %v621 = vrot.slane %v620, 4
      %v623 = vshll.u32 %v550, 16
      %v625 = vrot.slane %v623, 5
      %v626 = vsel %vm291, %v621, %v625
      %v628 = vshrl.u32 %v551, 16
      %v630 = vrot.slane %v628, 4
      %v631 = vshll.u32 %v551, 16
      %v633 = vrot.slane %v631, 5
      %v634 = vor.u32 %v630, %v633
      %v635 = vrot.slane %v634, 4
      %v637 = vshll.u32 %v552, 16
      %v639 = vrot.slane %v637, 5
      %v640 = vsel %vm291, %v635, %v639
      %v642 = vshrl.u32 %v553, 16
      %v644 = vrot.slane %v642, 4
      %v645 = vshll.u32 %v553, 16
      %v647 = vrot.slane %v645, 5
      %v648 = vor.u32 %v644, %v647
      %v649 = vrot.slane %v648, 4
      %v651 = vshll.u32 %v554, 16
      %v653 = vrot.slane %v651, 5
      %v654 = vsel %vm291, %v649, %v653
      %v656 = vshrl.u32 %v555, 16
      %v658 = vrot.slane %v656, 4
      %v659 = vshll.u32 %v555, 16
      %v661 = vrot.slane %v659, 5
      %v662 = vor.u32 %v658, %v661
      %v663 = vrot.slane %v662, 4
      %v665 = vshll.u32 %v556, 16
      %v667 = vrot.slane %v665, 5
      %v668 = vsel %vm291, %v663, %v667
      %669 = vrot.lane.b32.xlu0 %v570, 20
      %v670 = vpop.permute.xlu0 %669
      %671 = vrot.lane.b32.xlu0 %v584, 20
      %v672 = vpop.permute.xlu0 %671
      %673 = vrot.lane.b32.xlu0 %v598, 20
      %v674 = vpop.permute.xlu0 %673
      %675 = vrot.lane.b32.xlu0 %v612, 20
      %v676 = vpop.permute.xlu0 %675
      %677 = vrot.lane.b32.xlu0 %v626, 20
      %v678 = vpop.permute.xlu0 %677
      %679 = vrot.lane.b32.xlu0 %v640, 20
      %v680 = vpop.permute.xlu0 %679
      %681 = vrot.lane.b32.xlu0 %v654, 20
      %v682 = vpop.permute.xlu0 %681
      %683 = vrot.lane.b32.xlu0 %v668, 20
      %v684 = vpop.permute.xlu0 %683
      %vm693 = vcmask 191648
      %694 = vst.msk [vmem:[#allocation2] sm:$0xf] %vm693, %v670
      %695 = vst.msk [vmem:[#allocation2 + $0x4] sm:$0xf] %vm693, %v672
      %696 = vst.msk [vmem:[#allocation2 + $0x8] sm:$0xf] %vm693, %v674
      %697 = vst.msk [vmem:[#allocation2 + $0xc] sm:$0xf] %vm693, %v676
      %698 = vst.msk [vmem:[#allocation2 + $0x10] sm:$0xf] %vm693, %v678
      %699 = vst.msk [vmem:[#allocation2 + $0x14] sm:$0xf] %vm693, %v680
      %700 = vst.msk [vmem:[#allocation2 + $0x18] sm:$0xf] %vm693, %v682
      %701 = vst.msk [vmem:[#allocation2 + $0x1c] sm:$0xf] %vm693, %v684
      %s702 = sadd.s32 %s200, 1
      %s703 = smul.u32 %s702, 2
      %s704 = smul.addr %s703, 4
      %s705 = scalar_lea.vmem %s187, %s704
      %v706 = vld [vmem:[%s705] sm:$0xf]
      %v707 = vld [vmem:[%s705 + $0x8] sm:$0xf]
      %v708 = vld [vmem:[%s705 + $0x10] sm:$0xf]
      %v709 = vld [vmem:[%s705 + $0x18] sm:$0xf]
      %v710 = vld [vmem:[%s705 + $0x20] sm:$0xf]
      %v711 = vld [vmem:[%s705 + $0x28] sm:$0xf]
      %v712 = vld [vmem:[%s705 + $0x30] sm:$0xf]
      %v713 = vld [vmem:[%s705 + $0x38] sm:$0xf]
      %722 = vrot.lane.b32.xlu0 %v706, 24
      %v723 = vpop.permute.xlu0 %722
      %724 = vrot.lane.b32.xlu0 %v707, 24
      %v725 = vpop.permute.xlu0 %724
      %726 = vrot.lane.b32.xlu0 %v708, 24
      %v727 = vpop.permute.xlu0 %726
      %728 = vrot.lane.b32.xlu0 %v709, 24
      %v729 = vpop.permute.xlu0 %728
      %730 = vrot.lane.b32.xlu0 %v710, 24
      %v731 = vpop.permute.xlu0 %730
      %732 = vrot.lane.b32.xlu0 %v711, 24
      %v733 = vpop.permute.xlu0 %732
      %734 = vrot.lane.b32.xlu0 %v712, 24
      %v735 = vpop.permute.xlu0 %734
      %736 = vrot.lane.b32.xlu0 %v713, 24
      %v737 = vpop.permute.xlu0 %736
      %vm746 = vcmask 224448
      %747 = vst.msk [vmem:[#allocation2] sm:$0xf] %vm746, %v723
      %748 = vst.msk [vmem:[#allocation2 + $0x4] sm:$0xf] %vm746, %v725
      %749 = vst.msk [vmem:[#allocation2 + $0x8] sm:$0xf] %vm746, %v727
      %750 = vst.msk [vmem:[#allocation2 + $0xc] sm:$0xf] %vm746, %v729
      %751 = vst.msk [vmem:[#allocation2 + $0x10] sm:$0xf] %vm746, %v731
      %752 = vst.msk [vmem:[#allocation2 + $0x14] sm:$0xf] %vm746, %v733
      %753 = vst.msk [vmem:[#allocation2 + $0x18] sm:$0xf] %vm746, %v735
      %754 = vst.msk [vmem:[#allocation2 + $0x1c] sm:$0xf] %vm746, %v737
      %s755 = sadd.s32 %s703, 18
      %s756 = smul.addr %s755, 4
      %s757 = scalar_lea.vmem %s187, %s756
      %v758 = vld [vmem:[%s757] sm:$0xf]
      %v759 = vld [vmem:[%s757 + $0x8] sm:$0xf]
      %v760 = vld [vmem:[%s757 + $0x10] sm:$0xf]
      %v761 = vld [vmem:[%s757 + $0x18] sm:$0xf]
      %v762 = vld [vmem:[%s757 + $0x20] sm:$0xf]
      %v763 = vld [vmem:[%s757 + $0x28] sm:$0xf]
      %v764 = vld [vmem:[%s757 + $0x30] sm:$0xf]
      %v765 = vld [vmem:[%s757 + $0x38] sm:$0xf]
      %774 = vrot.lane.b32.xlu0 %v758, 28
      %v775 = vpop.permute.xlu0 %774
      %776 = vrot.lane.b32.xlu0 %v759, 28
      %v777 = vpop.permute.xlu0 %776
      %778 = vrot.lane.b32.xlu0 %v760, 28
      %v779 = vpop.permute.xlu0 %778
      %780 = vrot.lane.b32.xlu0 %v761, 28
      %v781 = vpop.permute.xlu0 %780
      %782 = vrot.lane.b32.xlu0 %v762, 28
      %v783 = vpop.permute.xlu0 %782
      %784 = vrot.lane.b32.xlu0 %v763, 28
      %v785 = vpop.permute.xlu0 %784
      %786 = vrot.lane.b32.xlu0 %v764, 28
      %v787 = vpop.permute.xlu0 %786
      %788 = vrot.lane.b32.xlu0 %v765, 28
      %v789 = vpop.permute.xlu0 %788
      %vm798 = vcmask 257248
      %799 = vst.msk [vmem:[#allocation2] sm:$0xf] %vm798, %v775
      %800 = vst.msk [vmem:[#allocation2 + $0x4] sm:$0xf] %vm798, %v777
      %801 = vst.msk [vmem:[#allocation2 + $0x8] sm:$0xf] %vm798, %v779
      %802 = vst.msk [vmem:[#allocation2 + $0xc] sm:$0xf] %vm798, %v781
      %803 = vst.msk [vmem:[#allocation2 + $0x10] sm:$0xf] %vm798, %v783
      %804 = vst.msk [vmem:[#allocation2 + $0x14] sm:$0xf] %vm798, %v785
      %805 = vst.msk [vmem:[#allocation2 + $0x18] sm:$0xf] %vm798, %v787
      %806 = vst.msk [vmem:[#allocation2 + $0x1c] sm:$0xf] %vm798, %v789
      %v807 = vld [vmem:[%s705] sm:$0xf]
      %v808 = vld [vmem:[%s705 + $0x4] sm:$0x1]
      %v809 = vld [vmem:[%s705 + $0x8] sm:$0xf]
      %v810 = vld [vmem:[%s705 + $0xc] sm:$0x1]
      %v811 = vld [vmem:[%s705 + $0x10] sm:$0xf]
      %v812 = vld [vmem:[%s705 + $0x14] sm:$0x1]
      %v813 = vld [vmem:[%s705 + $0x18] sm:$0xf]
      %v814 = vld [vmem:[%s705 + $0x1c] sm:$0x1]
      %v815 = vld [vmem:[%s705 + $0x20] sm:$0xf]
      %v816 = vld [vmem:[%s705 + $0x24] sm:$0x1]
      %v817 = vld [vmem:[%s705 + $0x28] sm:$0xf]
      %v818 = vld [vmem:[%s705 + $0x2c] sm:$0x1]
      %v819 = vld [vmem:[%s705 + $0x30] sm:$0xf]
      %v820 = vld [vmem:[%s705 + $0x34] sm:$0x1]
      %v821 = vld [vmem:[%s705 + $0x38] sm:$0xf]
      %v822 = vld [vmem:[%s705 + $0x3c] sm:$0x1]
      %v824 = vshrl.u32 %v807, 16
      %v826 = vrot.slane %v824, 4
      %v827 = vshll.u32 %v807, 16
      %v829 = vrot.slane %v827, 5
      %v830 = vor.u32 %v826, %v829
      %v831 = vrot.slane %v830, 4
      %v833 = vshll.u32 %v808, 16
      %v835 = vrot.slane %v833, 5
      %v836 = vsel %vm291, %v831, %v835
      %v838 = vshrl.u32 %v809, 16
      %v840 = vrot.slane %v838, 4
      %v841 = vshll.u32 %v809, 16
      %v843 = vrot.slane %v841, 5
      %v844 = vor.u32 %v840, %v843
      %v845 = vrot.slane %v844, 4
      %v847 = vshll.u32 %v810, 16
      %v849 = vrot.slane %v847, 5
      %v850 = vsel %vm291, %v845, %v849
      %v852 = vshrl.u32 %v811, 16
      %v854 = vrot.slane %v852, 4
      %v855 = vshll.u32 %v811, 16
      %v857 = vrot.slane %v855, 5
      %v858 = vor.u32 %v854, %v857
      %v859 = vrot.slane %v858, 4
      %v861 = vshll.u32 %v812, 16
      %v863 = vrot.slane %v861, 5
      %v864 = vsel %vm291, %v859, %v863
      %v866 = vshrl.u32 %v813, 16
      %v868 = vrot.slane %v866, 4
      %v869 = vshll.u32 %v813, 16
      %v871 = vrot.slane %v869, 5
      %v872 = vor.u32 %v868, %v871
      %v873 = vrot.slane %v872, 4
      %v875 = vshll.u32 %v814, 16
      %v877 = vrot.slane %v875, 5
      %v878 = vsel %vm291, %v873, %v877
      %v880 = vshrl.u32 %v815, 16
      %v882 = vrot.slane %v880, 4
      %v883 = vshll.u32 %v815, 16
      %v885 = vrot.slane %v883, 5
      %v886 = vor.u32 %v882, %v885
      %v887 = vrot.slane %v886, 4
      %v889 = vshll.u32 %v816, 16
      %v891 = vrot.slane %v889, 5
      %v892 = vsel %vm291, %v887, %v891
      %v894 = vshrl.u32 %v817, 16
      %v896 = vrot.slane %v894, 4
      %v897 = vshll.u32 %v817, 16
      %v899 = vrot.slane %v897, 5
      %v900 = vor.u32 %v896, %v899
      %v901 = vrot.slane %v900, 4
      %v903 = vshll.u32 %v818, 16
      %v905 = vrot.slane %v903, 5
      %v906 = vsel %vm291, %v901, %v905
      %v908 = vshrl.u32 %v819, 16
      %v910 = vrot.slane %v908, 4
      %v911 = vshll.u32 %v819, 16
      %v913 = vrot.slane %v911, 5
      %v914 = vor.u32 %v910, %v913
      %v915 = vrot.slane %v914, 4
      %v917 = vshll.u32 %v820, 16
      %v919 = vrot.slane %v917, 5
      %v920 = vsel %vm291, %v915, %v919
      %v922 = vshrl.u32 %v821, 16
      %v924 = vrot.slane %v922, 4
      %v925 = vshll.u32 %v821, 16
      %v927 = vrot.slane %v925, 5
      %v928 = vor.u32 %v924, %v927
      %v929 = vrot.slane %v928, 4
      %v931 = vshll.u32 %v822, 16
      %v933 = vrot.slane %v931, 5
      %v934 = vsel %vm291, %v929, %v933
      %935 = vrot.lane.b32.xlu0 %v836, 32
      %v936 = vpop.permute.xlu0 %935
      %937 = vrot.lane.b32.xlu0 %v850, 32
      %v938 = vpop.permute.xlu0 %937
      %939 = vrot.lane.b32.xlu0 %v864, 32
      %v940 = vpop.permute.xlu0 %939
      %941 = vrot.lane.b32.xlu0 %v878, 32
      %v942 = vpop.permute.xlu0 %941
      %943 = vrot.lane.b32.xlu0 %v892, 32
      %v944 = vpop.permute.xlu0 %943
      %945 = vrot.lane.b32.xlu0 %v906, 32
      %v946 = vpop.permute.xlu0 %945
      %947 = vrot.lane.b32.xlu0 %v920, 32
      %v948 = vpop.permute.xlu0 %947
      %949 = vrot.lane.b32.xlu0 %v934, 32
      %v950 = vpop.permute.xlu0 %949
      %vm959 = vcmask 290048
      %960 = vst.msk [vmem:[#allocation2] sm:$0xf] %vm959, %v936
      %961 = vst.msk [vmem:[#allocation2 + $0x4] sm:$0xf] %vm959, %v938
      %962 = vst.msk [vmem:[#allocation2 + $0x8] sm:$0xf] %vm959, %v940
      %963 = vst.msk [vmem:[#allocation2 + $0xc] sm:$0xf] %vm959, %v942
      %964 = vst.msk [vmem:[#allocation2 + $0x10] sm:$0xf] %vm959, %v944
      %965 = vst.msk [vmem:[#allocation2 + $0x14] sm:$0xf] %vm959, %v946
      %966 = vst.msk [vmem:[#allocation2 + $0x18] sm:$0xf] %vm959, %v948
      %967 = vst.msk [vmem:[#allocation2 + $0x1c] sm:$0xf] %vm959, %v950
      %v968 = vld [vmem:[#allocation2] sm:$0xf]
      %v969 = vld [vmem:[#allocation2 + $0x4] sm:$0xf]
      %v970 = vld [vmem:[#allocation2 + $0x8] sm:$0xf]
      %v971 = vld [vmem:[#allocation2 + $0xc] sm:$0xf]
      %v972 = vld [vmem:[#allocation2 + $0x10] sm:$0xf]
      %v973 = vld [vmem:[#allocation2 + $0x14] sm:$0xf]
      %v974 = vld [vmem:[#allocation2 + $0x18] sm:$0xf]
      %v975 = vld [vmem:[#allocation2 + $0x1c] sm:$0xf]
      %v976 = vld [vmem:[%s1] sm:$0xf]
      %v977 = vld [vmem:[%s1 + $0x4] sm:$0xf]
      %v978 = vld [vmem:[%s1 + $0x8] sm:$0xf]
      %v979 = vld [vmem:[%s1 + $0xc] sm:$0xf]
      %v980 = vld [vmem:[%s1 + $0x10] sm:$0x3]
      %v981 = vld [vmem:[%s2] sm:$0x1]
      %v983 = vperm.slane %v981, 0
      %v993 = vunpack.c.l.b16 %v968
      %v994 = vunpack.c.l.b16 %v969
      %v995 = vunpack.c.l.b16 %v970
      %v996 = vunpack.c.l.b16 %v971
      %v997 = vunpack.c.l.b16 %v972
      %v998 = vunpack.c.l.b16 %v973
      %v999 = vunpack.c.l.b16 %v974
      %v1000 = vunpack.c.l.b16 %v975
      %v1001 = vpack.c.b16 %v994, %v993
      %v1002 = vpack.c.b16 %v996, %v995
      %v1003 = vpack.c.b16 %v998, %v997
      %v1004 = vpack.c.b16 %v1000, %v999
      %v1010 = vunpack.c.l.b16 %v976
      %v1011 = vunpack.c.l.b16 %v977
      %v1012 = vunpack.c.l.b16 %v978
      %v1013 = vunpack.c.l.b16 %v979
      %v1014 = vunpack.c.l.b16 %v980
      %v1015 = vpack.c.b16 %v1011, %v1010
      %v1016 = vpack.c.b16 %v1013, %v1012
      %v1017 = vpack.c.b16 %v1014, %v1014
      %vm1020 = vcmask 293888
      %v1022 = vsel %vm1020, %v1001, 0
      %v1025 = vsel %vm1020, %v1002, 0
      %v1028 = vsel %vm1020, %v1003, 0
      %v1031 = vsel %vm1020, %v1004, 0
      %vm1033 = vcmask 1041408
      %v1035 = vsel %vm1033, %v1017, 0
      %1037 = vmatpush.bf16.msra.mxu0 0
      %1038 = vmatpush.bf16.msra.mxu0 0
      %1039 = vmatpush.bf16.msra.mxu0 0
      %1040 = vmatpush.bf16.msra.mxu0 0
      %1041 = vmatpush.bf16.msra.mxu0 0
      %1042 = vmatpush.bf16.msra.mxu0 %v1035
      %1043 = vmatpush.bf16.msra.mxu0 %v1016
      %1044 = vmatpush.bf16.msra.mxu0 %v1015
      %1045 = vmatmul.bf16.gmra.mxu0 %v1022
      %v1046 = vpop.f32.mrf.mxu0
      %v1047 = vadd.f32 %v983, %v1046
      %v1048 = vpop.f32.mrf.mxu0
      %v1049 = vadd.f32 %v983, %v1048
      %1050 = vmatmul.bf16.gmra.mxu0 %v1025
      %v1051 = vpop.f32.mrf.mxu0
      %v1052 = vadd.f32 %v983, %v1051
      %v1053 = vpop.f32.mrf.mxu0
      %v1054 = vadd.f32 %v983, %v1053
      %1055 = vmatmul.bf16.gmra.mxu0 %v1028
      %v1056 = vpop.f32.mrf.mxu0
      %v1057 = vadd.f32 %v983, %v1056
      %v1058 = vpop.f32.mrf.mxu0
      %v1059 = vadd.f32 %v983, %v1058
      %1060 = vmatmul.bf16.gmra.mxu0 %v1031
      %v1061 = vpop.f32.mrf.mxu0
      %v1062 = vadd.f32 %v983, %v1061
      %v1063 = vpop.f32.mrf.mxu0
      %v1064 = vadd.f32 %v983, %v1063
      %1065 = vdwg.mxu0
      %v1066 = vmax.f32 %v1047, 0.0
      %v1067 = vmax.f32 %v1049, 0.0
      %v1068 = vmax.f32 %v1052, 0.0
      %v1069 = vmax.f32 %v1054, 0.0
      %v1070 = vmax.f32 %v1057, 0.0
      %v1071 = vmax.f32 %v1059, 0.0
      %v1072 = vmax.f32 %v1062, 0.0
      %v1073 = vmax.f32 %v1064, 0.0
      %v1074 = vpack.c.bf16 %v1066, %v1066
      %v1075 = vpack.c.bf16 %v1067, %v1067
      %v1076 = vpack.c.bf16 %v1068, %v1068
      %v1077 = vpack.c.bf16 %v1069, %v1069
      %v1078 = vpack.c.bf16 %v1070, %v1070
      %v1079 = vpack.c.bf16 %v1071, %v1071
      %v1080 = vpack.c.bf16 %v1072, %v1072
      %v1081 = vpack.c.bf16 %v1073, %v1073
      %1082 = vst [vmem:[%s197] sm:$0xf] %v1074
      %1083 = vst [vmem:[%s197 + $0x4] sm:$0xf] %v1075
      %1084 = vst [vmem:[%s197 + $0x8] sm:$0xf] %v1076
      %1085 = vst [vmem:[%s197 + $0xc] sm:$0xf] %v1077
      %1086 = vst [vmem:[%s197 + $0x10] sm:$0xf] %v1078
      %1087 = vst [vmem:[%s197 + $0x14] sm:$0xf] %v1079
      %1088 = vst [vmem:[%s197 + $0x18] sm:$0xf] %v1080
      %1089 = vst [vmem:[%s197 + $0x1c] sm:$0xf] %v1081
      %s1090 = smul.u32 8, %s19
      %p1091 = scmp.lt.s32.totalorder %s18, 1
      %s1092 = scalar_select %p1091, %s18, 1
      %p1093 = scmp.lt.s32.totalorder %s1090, 7
      %s1094 = scalar_select %p1093, %s1090, 7
      %s1095 = smul.addr %s1092, 8
      %s1096 = sadd.s32 %s1094, %s1095
      %s1097 = smul.addr %s1096, 4
      %s1098 = scalar_lea.vmem %s3, %s1097
      // Predicated region
      $region33: #{conv_bn_relu.1} parent=31 // pred_check
        %p1099 = pneg %p114
      $region34: #{conv_bn_relu.1} parent=31 // pred_check_branch
        %1101 = sbr.rel (%p1099) target = $region36
      $region35: #{conv_bn_relu.1} parent=31 // pred_region
        %s1102 = smul.u32 8, %s19
      $region36: #{conv_bn_relu.1} parent=31 // pred_fallthru
        _
    $region32: #{conv_bn_relu.1} parent=5 // pred_fallthru
      _
    %p1103 = scmp.le.s32.totalorder 2, %s9
    // Predicated region
    $region37: #{conv_bn_relu.1} parent=5 // pred_check
      %p1104 = pneg %p1103
    $region38: #{conv_bn_relu.1} parent=5 // pred_check_branch
      %1106 = sbr.rel (%p1104) target = $region40
    $region39: #{conv_bn_relu.1} parent=5 // pred_region
      %s1107 = ssub.s32 %s9, 2
      // Predicated region
      $region41: #{conv_bn_relu.1} parent=39 // pred_check
        %p1108 = pneg %p120
      $region42: #{conv_bn_relu.1} parent=39 // pred_check_branch
        %1110 = sbr.rel (%p1108) target = $region44
      $region43: #{conv_bn_relu.1} parent=39 // pred_region
        %s1111 = smul.u32 8, %s21
        %p1112 = scmp.lt.s32.totalorder %s20, 1
        %s1113 = scalar_select %p1112, %s20, 1
        %p1114 = scmp.lt.s32.totalorder %s1111, 7
        %s1115 = scalar_select %p1114, %s1111, 7
        %s1116 = smul.addr %s1113, 8
        %s1117 = sadd.s32 %s1115, %s1116
        %s1118 = smul.addr %s1117, 4
        %s1119 = scalar_lea.vmem %s3, %s1118
      $region44: #{conv_bn_relu.1} parent=39 // pred_fallthru
        _
    $region40: #{conv_bn_relu.1} parent=5 // pred_fallthru
      _
  $region6: #{conv_bn_relu.1} parent=0 // loop_footer
    %s13 = sadd.s32 1, %s9
  $region7: #{conv_bn_relu.1} parent=0 // loop_footer_branch
    %8 = sbr.rel target = $region3
  $region8: #{conv_bn_relu.1} parent=0 // loop_exit
    _

</llo_original>
